<compile_context>
chip_gen: v5e
topology: v5e:2x2
jax: 0.10.0
libtpu: 0.0.40
codegen_flags: <defaults>
</compile_context>

<pallas_src>
import math

import jax
import jax.numpy as jnp
from jax.experimental import pallas as pl
from jax.experimental.pallas import tpu as pltpu

# -------------------- small config (consistent with the module) --------------------
D_MODEL = 32      # config.d_model
N_VOCAB = 8       # config.n_vocab
BATCH = 2
SEQ = 8

_SUBLANE = 8      # f32 sublane granularity


# -------------------- fused Pallas kernel --------------------
def _cls_head_kernel(x_ref, w1_ref, b1_ref, w2_ref, b2_ref, o_ref):
    x = x_ref[...]                                                      # (tm, D), caller dtype
    # layer_1 + tanh  (dropout is identity at inference); f32 accumulation/epilogue
    h = jnp.tanh(jnp.dot(x, w1_ref[...],
                         preferred_element_type=jnp.float32) + b1_ref[...])   # (tm, D) f32
    # layer_2
    logits = jnp.dot(h, w2_ref[...],
                     preferred_element_type=jnp.float32) + b2_ref[...]        # (tm, V) f32
    # numerically-stable log_softmax along the last axis
    mx = jnp.max(logits, axis=-1, keepdims=True)
    z = logits - mx
    lse = jnp.log(jnp.sum(jnp.exp(z), axis=-1, keepdims=True))
    o_ref[...] = (z - lse).astype(o_ref.dtype)


def cls_head_forward(params, x, *, row_tile=1024):
    """x: (..., d_model) -> log-probs (..., n_vocab), one fused pallas_call."""
    w1, b1, w2, b2 = params['w1'], params['b1'], params['w2'], params['b2']
    D = w1.shape[0]
    V = w2.shape[1]
    lead = x.shape[:-1]
    M = int(math.prod(lead)) if lead else 1
    x2 = x.reshape(M, D)                      # keep caller dtype (bf16 stays bf16)

    # Tile choice:
    #  * M <= row_tile : single grid step, tm = M rounded up to a sublane multiple
    #  * M >  row_tile : row_tile-row tiles (multiple of 8), M padded to the tile
    #                    multiple so we never ask for one giant full-extent block.
    if M <= row_tile:
        tm = max(_SUBLANE, -(-M // _SUBLANE) * _SUBLANE)
    else:
        assert row_tile % _SUBLANE == 0, "row_tile must be a multiple of 8"
        tm = row_tile
    M_pad = -(-M // tm) * tm
    if M_pad != M:
        x2 = jnp.pad(x2, ((0, M_pad - M), (0, 0)))
    grid = (M_pad // tm,)

    # Megacore sharding only when each TensorCore gets substantial work (v7x);
    # for 1-2 sub-microsecond steps a plain serial loop is cheaper.
    dim_sem = ("parallel",) if (grid[0] >= 4 and tm >= 512) else ("arbitrary",)

    cost = pl.CostEstimate(
        flops=2 * M_pad * D * D + 2 * M_pad * D * V,
        transcendentals=M_pad * D + M_pad * V + M_pad,          # tanh, exp, log
        bytes_accessed=(x2.dtype.itemsize * M_pad * D
                        + 4 * (D * D + D + D * V + V + M_pad * V)),
    )

    out = pl.pallas_call(
        _cls_head_kernel,
        grid=grid,
        out_shape=jax.ShapeDtypeStruct((M_pad, V), jnp.float32),
        in_specs=[pl.BlockSpec((tm, D), lambda i: (i, 0)),   # x rows for this tile
                  pl.BlockSpec((D, D), lambda i: (0, 0)),    # w1 (VMEM resident)
                  pl.BlockSpec((1, D), lambda i: (0, 0)),    # b1
                  pl.BlockSpec((D, V), lambda i: (0, 0)),    # w2 (VMEM resident)
                  pl.BlockSpec((1, V), lambda i: (0, 0))],   # b2
        out_specs=pl.BlockSpec((tm, V), lambda i: (i, 0)),
        compiler_params=pltpu.CompilerParams(dimension_semantics=dim_sem),
        cost_estimate=cost,
    )(x2, w1, b1, w2, b2)

    if M_pad != M:
        out = out[:M]
    return out.reshape(lead + (V,))


# -------------------- deterministic parameter init (PyTorch nn.Linear style) --------------------
def init_linear(key, fan_in, fan_out):
    kw, kb = jax.random.split(key)
    bound = 1.0 / math.sqrt(fan_in)
    return {'w': jax.random.uniform(kw, (fan_in, fan_out), jnp.float32, -bound, bound),
            'b': jax.random.uniform(kb, (1, fan_out), jnp.float32, -bound, bound)}


def init_params(key):
    k1, k2 = jax.random.split(key)
    l1 = init_linear(k1, D_MODEL, D_MODEL)
    l2 = init_linear(k2, D_MODEL, N_VOCAB)   # init_weights=None -> default init
    return {'w1': l1['w'], 'b1': l1['b'], 'w2': l2['w'], 'b2': l2['b']}


# -------------------- pure-JAX reference for correctness --------------------
def cls_head_ref(params, x):
    h = jnp.tanh(x @ params['w1'] + params['b1'])
    logits = h @ params['w2'] + params['b2']
    return jax.nn.log_softmax(logits, axis=-1)


# -------------------- main --------------------
if __name__ == "__main__":
    key = jax.random.PRNGKey(0)
    kp, kx, kx2 = jax.random.split(key, 3)
    params = init_params(kp)

    fwd = jax.jit(cls_head_forward, static_argnames=("row_tile",))

    # 1) (B, L, d_model) activations, M=16: whole head in a single grid step
    x = jax.random.normal(kx, (BATCH, SEQ, D_MODEL), jnp.float32)
    y = jax.block_until_ready(fwd(params, x))
    assert y.shape == (BATCH, SEQ, N_VOCAB) and y.dtype == jnp.float32
    assert bool(jnp.all(jnp.isfinite(y)))
    assert bool(jnp.allclose(jnp.sum(jnp.exp(y), axis=-1), 1.0, atol=1e-5))
    assert bool(jnp.allclose(y, cls_head_ref(params, x), atol=1e-5, rtol=1e-5))

    # 2) ragged leading dims (M=21 -> padded to 24), still a single fused call
    xr = jax.random.normal(kx2, (3, 7, D_MODEL), jnp.float32)
    yr = jax.block_until_ready(fwd(params, xr))
    assert yr.shape == (3, 7, N_VOCAB)
    assert bool(jnp.allclose(yr, cls_head_ref(params, xr), atol=1e-5, rtol=1e-5))

    # 3) multi-step pipelined path (small row_tile forces grid > 1 + tail padding)
    ym = jax.block_until_ready(fwd(params, xr, row_tile=8))
    assert bool(jnp.allclose(ym, cls_head_ref(params, xr), atol=1e-5, rtol=1e-5))

    # 4) bf16 activations: no f32 upcast in the wrapper, epilogue stays f32
    xb = x.astype(jnp.bfloat16)
    yb = jax.block_until_ready(fwd(params, xb))
    assert yb.shape == (BATCH, SEQ, N_VOCAB) and yb.dtype == jnp.float32
    assert bool(jnp.all(jnp.isfinite(yb)))
    assert bool(jnp.allclose(jnp.sum(jnp.exp(yb), axis=-1), 1.0, atol=1e-5))
    assert bool(jnp.allclose(yb, cls_head_ref(params, xb.astype(jnp.float32)),
                             atol=2e-3, rtol=2e-3))

    print("KERNEL_OK")
</pallas_src>

<mosaic_0001>
module attributes {stable_mosaic.version = 11 : i64} {
  func.func @_cls_head_kernel(%arg0: i32, %arg1: memref<16x32xf32, #tpu.memory_space<vmem>>, %arg2: memref<32x32xf32, #tpu.memory_space<vmem>>, %arg3: memref<1x32xf32, #tpu.memory_space<vmem>>, %arg4: memref<32x8xf32, #tpu.memory_space<vmem>>, %arg5: memref<1x8xf32, #tpu.memory_space<vmem>>, %arg6: memref<16x8xf32, #tpu.memory_space<vmem>>) attributes {dimension_semantics = [#tpu.dimension_semantics<arbitrary>], iteration_bounds = array<i64: 1>, scalar_prefetch = 0 : i64, scratch_operands = 0 : i64, tpu.core_type = #tpu.core_type<tc>, window_params = [{transform_indices = @transform_0, window_bounds = array<i64: 16, 32>}, {pipeline_mode = #tpu.pipeline_mode<synchronous>, transform_indices = @transform_1, window_bounds = array<i64: 32, 32>}, {pipeline_mode = #tpu.pipeline_mode<synchronous>, transform_indices = @transform_2, window_bounds = array<i64: 1, 32>}, {pipeline_mode = #tpu.pipeline_mode<synchronous>, transform_indices = @transform_3, window_bounds = array<i64: 32, 8>}, {pipeline_mode = #tpu.pipeline_mode<synchronous>, transform_indices = @transform_4, window_bounds = array<i64: 1, 8>}, {transform_indices = @transform_5, window_bounds = array<i64: 16, 8>}]} {
    %c0 = arith.constant 0 : index
    %c0_0 = arith.constant 0 : index
    %0 = vector.load %arg1[%c0, %c0_0] : memref<16x32xf32, #tpu.memory_space<vmem>>, vector<16x32xf32>
    %c0_1 = arith.constant 0 : index
    %c0_2 = arith.constant 0 : index
    %1 = vector.load %arg2[%c0_1, %c0_2] : memref<32x32xf32, #tpu.memory_space<vmem>>, vector<32x32xf32>
    %cst = arith.constant dense<0.000000e+00> : vector<16x32xf32>
    %2 = tpu.matmul %0, %1, %cst {dimension_numbers = #tpu.dot_dimension_numbers<[1], [0], [0], [1], [0, 0, 1, 1], [], []>} : vector<16x32xf32>, vector<32x32xf32>, vector<16x32xf32> -> vector<16x32xf32>
    %c0_3 = arith.constant 0 : index
    %c0_4 = arith.constant 0 : index
    %3 = vector.load %arg3[%c0_3, %c0_4] : memref<1x32xf32, #tpu.memory_space<vmem>>, vector<1x32xf32>
    %4 = vector.broadcast %3 : vector<1x32xf32> to vector<16x32xf32>
    %5 = arith.addf %2, %4 : vector<16x32xf32>
    %6 = math.tanh %5 : vector<16x32xf32>
    %c0_5 = arith.constant 0 : index
    %c0_6 = arith.constant 0 : index
    %7 = vector.load %arg4[%c0_5, %c0_6] : memref<32x8xf32, #tpu.memory_space<vmem>>, vector<32x8xf32>
    %cst_7 = arith.constant dense<0.000000e+00> : vector<16x8xf32>
    %8 = tpu.matmul %6, %7, %cst_7 {dimension_numbers = #tpu.dot_dimension_numbers<[1], [0], [0], [1], [0, 0, 1, 1], [], []>} : vector<16x32xf32>, vector<32x8xf32>, vector<16x8xf32> -> vector<16x8xf32>
    %c0_8 = arith.constant 0 : index
    %c0_9 = arith.constant 0 : index
    %9 = vector.load %arg5[%c0_8, %c0_9] : memref<1x8xf32, #tpu.memory_space<vmem>>, vector<1x8xf32>
    %10 = vector.broadcast %9 : vector<1x8xf32> to vector<16x8xf32>
    %11 = arith.addf %8, %10 : vector<16x8xf32>
    %cst_10 = arith.constant dense<0xFF800000> : vector<16xf32>
    %12 = vector.multi_reduction <maximumf>, %11, %cst_10 [1] : vector<16x8xf32> to vector<16xf32>
    %13 = vector.shape_cast %12 : vector<16xf32> to vector<16x1xf32>
    %14 = vector.broadcast %13 : vector<16x1xf32> to vector<16x8xf32>
    %15 = arith.subf %11, %14 : vector<16x8xf32>
    %16 = math.exp %15 : vector<16x8xf32>
    %cst_11 = arith.constant dense<0.000000e+00> : vector<16xf32>
    %17 = vector.multi_reduction <add>, %16, %cst_11 [1] : vector<16x8xf32> to vector<16xf32>
    %18 = vector.shape_cast %17 : vector<16xf32> to vector<16x1xf32>
    %19 = math.log %18 : vector<16x1xf32>
    %20 = vector.broadcast %19 : vector<16x1xf32> to vector<16x8xf32>
    %21 = arith.subf %15, %20 : vector<16x8xf32>
    %c0_12 = arith.constant 0 : index
    %c0_13 = arith.constant 0 : index
    %22 = vector.load %arg6[%c0_12, %c0_13] : memref<16x8xf32, #tpu.memory_space<vmem>>, vector<16x8xf32>
    tpu.vector_store %arg6[%c0_12, %c0_13], %21 {strides = array<i32>} : memref<16x8xf32, #tpu.memory_space<vmem>>, vector<16x8xf32>,
    return
  }
  func.func @transform_0(%arg0: i32) -> (i32, i32) {
    %c0_i32 = arith.constant 0 : i32
    %c0_i32_0 = arith.constant 0 : i32
    return %arg0, %c0_i32 : i32, i32
  }
  func.func @transform_1(%arg0: i32) -> (i32, i32) {
    %c0_i32 = arith.constant 0 : i32
    %c0_i32_0 = arith.constant 0 : i32
    %c0_i32_1 = arith.constant 0 : i32
    return %c0_i32, %c0_i32_0 : i32, i32
  }
  func.func @transform_2(%arg0: i32) -> (i32, i32) {
    %c0_i32 = arith.constant 0 : i32
    %c0_i32_0 = arith.constant 0 : i32
    %c0_i32_1 = arith.constant 0 : i32
    return %c0_i32, %c0_i32_0 : i32, i32
  }
  func.func @transform_3(%arg0: i32) -> (i32, i32) {
    %c0_i32 = arith.constant 0 : i32
    %c0_i32_0 = arith.constant 0 : i32
    %c0_i32_1 = arith.constant 0 : i32
    return %c0_i32, %c0_i32_0 : i32, i32
  }
  func.func @transform_4(%arg0: i32) -> (i32, i32) {
    %c0_i32 = arith.constant 0 : i32
    %c0_i32_0 = arith.constant 0 : i32
    %c0_i32_1 = arith.constant 0 : i32
    return %c0_i32, %c0_i32_0 : i32, i32
  }
  func.func @transform_5(%arg0: i32) -> (i32, i32) {
    %c0_i32 = arith.constant 0 : i32
    %c0_i32_0 = arith.constant 0 : i32
    return %arg0, %c0_i32 : i32, i32
  }
}

</mosaic_0001>

<llo_original>
// kernel: cls_head_forward.1
$region0: #{cls_head_forward.1}
  #allocation0 [shape = 'u32[]', space=smem, size = 0x4, offset = 0x4, fixed_abs, tag = 'smem constant byte address 0x4 - core index']
  #allocation1 [shape = 'u32[72,128]{1,0:T(1,128)}', space=vmem, size = 0x9000, scoped, tag = 'internal scratch']
  %s0 = inlined_call_operand.hbm [shape: f32[16,32], index: 0, kind: input, shape index: {}]
  %s1 = inlined_call_operand.vmem [shape: f32[32,32], index: 1, kind: input, shape index: {}]
  %s2 = inlined_call_operand.vmem [shape: f32[1,32], index: 2, kind: input, shape index: {}]
  %s3 = inlined_call_operand.vmem [shape: f32[32,8], index: 3, kind: input, shape index: {}]
  %s4 = inlined_call_operand.vmem [shape: f32[1,8], index: 4, kind: input, shape index: {}]
  %s5 = inlined_call_operand.hbm [shape: f32[16,8], index: 5, kind: output, shape index: {}]
  %s6 = sld [smem:[#allocation0]]
  $region34: #{cls_head_forward.1} parent=0
    _
  %s8 = ssub.s32 1, %s6
  %s9 = scalar_select 0, %s8, %s6
  $region1: #{cls_head_forward.1} parent=0
    #allocation2 [shape = 'u8[8192]{0}', space=vmem, size = 0x2000, scoped, tag = 'input window, operand 0, single buffered']
    #allocation3 [shape = 's32[1]{0}', space=sflag, size = 0x4, scoped, tag = 'scoped memory for cls_head_forward.1']
    #allocation4 [shape = 's32[1]{0}', space=sflag, size = 0x4, scoped, tag = 'scoped memory for cls_head_forward.1']
    #allocation5 [shape = 'u8[8192]{0}', space=vmem, size = 0x2000, scoped, tag = 'output window, operand 0, single buffered']
    %10 = vsyncpa [#allocation3], 0
    %11 = vsyncpa [#allocation4], 0
    // Predicated region
    $region2: #{cls_head_forward.1} parent=1 // pred_check
      _
    $region3: #{cls_head_forward.1} parent=1 // pred_check_branch
      %13 = sbr.rel (0) target = $region5
    $region4: #{cls_head_forward.1} parent=1 // pred_region
      %15 = vsyncadd [#allocation3], 0
      %s16 = sshll.u32 %s0, 4
      %s17 = int_to_ptr.hbm [resolvable:$true] %s16
      %s18 = sshll.u32 [#allocation2], 4
      %s19 = int_to_ptr.vmem [resolvable:$true] %s18
      %24 = dma.hbm_to_vmem [thread:$0]  %s17, 256, %s19, [#allocation3], 128, 128, 8
    $region5: #{cls_head_forward.1} parent=1 // pred_fallthru
      _
    // Predicated region
    $region6: #{cls_head_forward.1} parent=1 // pred_check
      _
    $region7: #{cls_head_forward.1} parent=1 // pred_check_branch
      %26 = sbr.rel (0) target = $region9
    $region8: #{cls_head_forward.1} parent=1 // pred_region
      _
    $region9: #{cls_head_forward.1} parent=1 // pred_fallthru
      _
    // Predicated region
    $region10: #{cls_head_forward.1} parent=1 // pred_check
      _
    $region11: #{cls_head_forward.1} parent=1 // pred_check_branch
      %28 = sbr.rel (0) target = $region13
    $region12: #{cls_head_forward.1} parent=1 // pred_region
      _
    $region13: #{cls_head_forward.1} parent=1 // pred_fallthru
      _
    // Predicated region
    $region14: #{cls_head_forward.1} parent=1 // pred_check
      _
    $region15: #{cls_head_forward.1} parent=1 // pred_check_branch
      %30 = sbr.rel (0) target = $region17
    $region16: #{cls_head_forward.1} parent=1 // pred_region
      _
    $region17: #{cls_head_forward.1} parent=1 // pred_fallthru
      _
    // Predicated region
    $region18: #{cls_head_forward.1} parent=1 // pred_check
      _
    $region19: #{cls_head_forward.1} parent=1 // pred_check_branch
      %32 = sbr.rel (0) target = $region21
    $region20: #{cls_head_forward.1} parent=1 // pred_region
      _
    $region21: #{cls_head_forward.1} parent=1 // pred_fallthru
      _
    // Predicated region
    $region22: #{cls_head_forward.1} parent=1 // pred_check
      _
    $region23: #{cls_head_forward.1} parent=1 // pred_check_branch
      %34 = sbr.rel (0) target = $region25
    $region24: #{cls_head_forward.1} parent=1 // pred_region
      %36 = dma.done [#allocation3], 256
    $region25: #{cls_head_forward.1} parent=1 // pred_fallthru
      _
    %v37 = vld [vmem:[#allocation2] sm:$0xff]
    %v38 = vld [vmem:[#allocation2 + $0x8] sm:$0xff]
    %v39 = vld [vmem:[%s1] sm:$0xff]
    %v40 = vld [vmem:[%s1 + $0x8] sm:$0xff]
    %v41 = vld [vmem:[%s1 + $0x10] sm:$0xff]
    %v42 = vld [vmem:[%s1 + $0x18] sm:$0xff]
    %v43 = vld [vmem:[%s2] sm:$0x1]
    %v45 = vperm.slane %v43, 0
    %vm47 = vcmask 261120
    %v49 = vsel %vm47, %v37, 0
    %v52 = vsel %vm47, %v38, 0
    %54 = vmatpush.msra.mxu0 0.0
    %55 = vmatpush.msra.mxu0 0.0
    %56 = vmatpush.msra.mxu0 0.0
    %57 = vmatpush.msra.mxu0 0.0
    %58 = vmatpush.msra.mxu0 0.0
    %59 = vmatpush.msra.mxu0 0.0
    %60 = vmatpush.msra.mxu0 0.0
    %61 = vmatpush.msra.mxu0 0.0
    %62 = vmatpush.msra.mxu0 0.0
    %63 = vmatpush.msra.mxu0 0.0
    %64 = vmatpush.msra.mxu0 0.0
    %65 = vmatpush.msra.mxu0 0.0
    %66 = vmatpush.msra.mxu0 %v42
    %67 = vmatpush.msra.mxu0 %v41
    %68 = vmatpush.msra.mxu0 %v40
    %69 = vmatpush.msra.mxu0 %v39
    %70 = vmatmul.f32.gmra.mxu0 %v49
    %v71 = vpop.f32.mrf.mxu0
    %v72 = vadd.f32 %v45, %v71
    %73 = vmatmul.f32.gmra.mxu0 %v52
    %v74 = vpop.f32.mrf.mxu0
    %v75 = vadd.f32 %v45, %v74
    %76 = vdwg.mxu0
    %v77 = vtanh.pop %v72
    %v78 = vtanh.pop %v75
    %v79 = vld [vmem:[%s3] sm:$0xff]
    %v80 = vld [vmem:[%s3 + $0x8] sm:$0xff]
    %v81 = vld [vmem:[%s3 + $0x10] sm:$0xff]
    %v82 = vld [vmem:[%s3 + $0x18] sm:$0xff]
    %v83 = vld [vmem:[%s4] sm:$0x1]
    %v85 = vperm.slane %v83, 0
    %v88 = vsel %vm47, %v77, 0
    %v91 = vsel %vm47, %v78, 0
    %93 = vmatpush.msra.mxu0 0.0
    %94 = vmatpush.msra.mxu0 0.0
    %95 = vmatpush.msra.mxu0 0.0
    %96 = vmatpush.msra.mxu0 0.0
    %97 = vmatpush.msra.mxu0 0.0
    %98 = vmatpush.msra.mxu0 0.0
    %99 = vmatpush.msra.mxu0 0.0
    %100 = vmatpush.msra.mxu0 0.0
    %101 = vmatpush.msra.mxu0 0.0
    %102 = vmatpush.msra.mxu0 0.0
    %103 = vmatpush.msra.mxu0 0.0
    %104 = vmatpush.msra.mxu0 0.0
    %105 = vmatpush.msra.mxu0 %v82
    %106 = vmatpush.msra.mxu0 %v81
    %107 = vmatpush.msra.mxu0 %v80
    %108 = vmatpush.msra.mxu0 %v79
    %109 = vmatmul.f32.gmra.mxu0 %v88
    %v110 = vpop.f32.mrf.mxu0
    %v111 = vadd.f32 %v85, %v110
    %112 = vmatmul.f32.gmra.mxu0 %v91
    %v113 = vpop.f32.mrf.mxu0
    %v114 = vadd.f32 %v85, %v113
    %115 = vdwg.mxu0
    %vm116 = vcmask 64512
    %v117 = vsel %vm116, %v111, -inf
    %118 = vmax.xlane.f32.xlu0 %v117
    %v119 = vpop.xlane.xlu0 %118
    %v120 = vsel %vm116, %v114, -inf
    %121 = vmax.xlane.f32.xlu0 %v120
    %v122 = vpop.xlane.xlu0 %121
    %v123 = vsub.f32 %v111, %v119
    %v124 = vsub.f32 %v114, %v122
    %v125 = vmul.f32 %v123, 1.442695
    %v126 = vpow.pop %v125
    %v127 = vmul.f32 %v124, 1.442695
    %v128 = vpow.pop %v127
    %v129 = vsel %vm116, %v126, 0.0
    %130 = vadd.xlane.f32.xlu0 %v129
    %v131 = vpop.xlane.xlu0 %130
    %v132 = vsel %vm116, %v128, 0.0
    %133 = vadd.xlane.f32.xlu0 %v132
    %v134 = vpop.xlane.xlu0 %133
    %v135 = vlog2.pop %v131
    %v136 = vmul.f32 %v135, 0.6931472
    %v137 = vlog2.pop %v134
    %v138 = vmul.f32 %v137, 0.6931472
    %v139 = vsub.f32 %v123, %v136
    %v140 = vsub.f32 %v124, %v138
    %141 = vst.msk [vmem:[#allocation5] sm:$0xff] %vm116, %v139
    %142 = vst.msk [vmem:[#allocation5 + $0x8] sm:$0xff] %vm116, %v140
    // Predicated region
    $region26: #{cls_head_forward.1} parent=1 // pred_check
      _
    $region27: #{cls_head_forward.1} parent=1 // pred_check_branch
      %144 = sbr.rel (0) target = $region29
    $region28: #{cls_head_forward.1} parent=1 // pred_region
      %146 = vsyncadd [#allocation4], 0
      %s147 = sshll.u32 [#allocation5], 4
      %s148 = int_to_ptr.vmem [resolvable:$true] %s147
      %s149 = sshll.u32 %s5, 4
      %s150 = int_to_ptr.hbm [resolvable:$true] %s149
      %155 = dma.vmem_to_hbm [thread:$0]  %s148, 256, %s150, [#allocation4], 128, 128, 8
    $region29: #{cls_head_forward.1} parent=1 // pred_fallthru
      _
    // Predicated region
    $region30: #{cls_head_forward.1} parent=1 // pred_check
      _
    $region31: #{cls_head_forward.1} parent=1 // pred_check_branch
      %157 = sbr.rel (0) target = $region33
    $region32: #{cls_head_forward.1} parent=1 // pred_region
      %159 = dma.done [#allocation4], 256
    $region33: #{cls_head_forward.1} parent=1 // pred_fallthru
      _
    %160 = vsyncpa [#allocation3], 1
    %161 = vsyncpa [#allocation4], 1

</llo_original>
